<compile_context>
chip_gen: v7x
topology: tpu7x:2x2x1
jax: 0.10.0
libtpu: 0.0.40
codegen_flags: <defaults>
</compile_context>

<pallas_src>
import functools

import jax
import jax.numpy as jnp
from jax import lax
from jax.experimental import pallas as pl
from jax.experimental.pallas import tpu as pltpu


def _choose_batch_block(N, C, Cout, HW, itemsize=4, vmem_budget=12 << 20):
    """Number of images per grid step.

    Constraints / preferences:
      * BN divides N (no tail-step masking needed).
      * x block is (BN*C, HW): its sublane extent must be a multiple of 8 or the
        full N*C extent (f32 (8,128) tiling rule).
      * ~2x (input + output) blocks fit a budget safe on every generation
        (v5e 16 MiB scoped default, v7x 64 MiB total VMEM).
      * Prefer the SMALLEST feasible BN that fills the 8-sublane tile, so
        realistic batch sizes keep >=2 grid steps (DMA/compute pipelining and
        megacore sharding on v7x).
    """
    feasible = []
    for d in range(1, N + 1):
        if N % d:
            continue
        rows_ok = (d * C) % 8 == 0 or d == N
        fits = 2 * d * (C + Cout) * HW * itemsize <= vmem_budget
        if rows_ok and fits:
            feasible.append(d)
    if not feasible:
        return N
    for d in feasible:
        if d * C >= 8:
            return d
    return feasible[-1]


def _make_dsconv_kernel(KH, KW, H, W, BN, C, Cout, use_mxu):
    HW = H * W
    Ho = H - KH + 1
    L = Ho * W  # only rows i < Ho are ever written back

    def kernel(x_ref, wdw_ref, dwsh_ref, wpw_ref, pwsh_ref, o_ref):
        # x_ref:    (BN*C, HW)        batch flattened onto sublanes, H*W on lanes
        # wdw_ref:  (KH*KW, BN*C, 1)  depthwise taps (BN scale folded, tiled per image)
        # dwsh_ref: (BN*C, 1)         depthwise folded bias/BN shift
        # wpw_ref:  (BN*Cout, BN*C)   block-diag folded pointwise weights   [MXU path]
        #           (C, Cout, 1)      transposed folded pointwise weights   [VPU path]
        # pwsh_ref: (Cout, 1)         pointwise folded bias/BN shift
        # o_ref:    (BN, Cout, Ho*W)  rows i >= Ho are never written
        x = x_ref[...]                       # (BN*C, HW), full (8,128) vregs
        wdw = wdw_ref[...]

        # --- depthwise 'valid' KHxKW conv: out[p] = sum_k x[p + kh*W + kw] * w_k.
        # Taps are lane rolls (XLU slot, overlaps the VPU FMAs).  Roll wrap-around
        # only lands at flat positions with i >= Ho or j >= Wo, which are dropped
        # below / cropped by the wrapper.  Single pass over the whole batch block.
        acc = x * wdw[0]
        for kh in range(KH):
            for kw in range(KW):
                s = kh * W + kw
                if s == 0:
                    continue
                acc = acc + pltpu.roll(x, shift=HW - s, axis=1) * wdw[kh * KW + kw]
        dw = jnp.maximum(acc + dwsh_ref[...], 0.0)            # folded BN shift + ReLU

        # --- pointwise 1x1 conv, once per grid step for the whole batch block.
        if use_mxu:
            # ONE MXU matmul: block-diag (BN*Cout, BN*C) @ (BN*C, HW).
            # Default precision (single-pass bf16); HIGHEST would cost 6x passes.
            pw = jnp.dot(wpw_ref[...], dw,
                         preferred_element_type=jnp.float32)  # (BN*Cout, HW)
            pw = pw.reshape(BN, Cout, HW)
        else:
            # Toy channel counts (C, Cout << MXU tile): C broadcast-FMAs on the VPU
            # in f32 — cheaper than paying MXU weight-push/result-drain for an
            # (8,4) x (4,HW) matmul, and exact w.r.t. the f32 reference.
            dw3 = dw.reshape(BN, C, HW)
            pw = wpw_ref[0][None] * dw3[:, 0][:, None, :]      # (BN, Cout, HW)
            for c in range(1, C):
                pw = pw + wpw_ref[c][None] * dw3[:, c][:, None, :]

        y = jnp.maximum(pw + pwsh_ref[...][None], 0.0)         # shift + ReLU
        o_ref[...] = y[:, :, :L].astype(o_ref.dtype)           # drop rows i >= Ho

    return kernel


def depth_separable_conv2d_pallas(x_nchw, params, kernel_size=3):
    """x_nchw: (N, C, H, W) float32. Returns (N, Cout, Ho, Wo) float32 (NCHW)."""
    KH = KW = kernel_size
    N, C, H, W = x_nchw.shape
    Ho, Wo = H - KH + 1, W - KW + 1
    Cout = params["w_pw"].shape[0]
    HW, L = H * W, Ho * W

    # ---------- plain-JAX glue: fold conv bias + BN(eval) into scale/shift ----------
    eps = 1e-5
    s_dw = params["dw_gamma"] * lax.rsqrt(params["dw_var"] + eps)            # (C,)
    w_dw = params["w_dw"][:, 0, :, :] * s_dw[:, None, None]                  # (C, KH, KW)
    w_dw = jnp.transpose(w_dw.reshape(C, KH * KW), (1, 0))                   # (KH*KW, C)
    dw_shift = s_dw * (params["b_dw"] - params["dw_mean"]) + params["dw_beta"]  # (C,)

    s_pw = params["pw_gamma"] * lax.rsqrt(params["pw_var"] + eps)            # (Cout,)
    w_pw = params["w_pw"][:, :, 0, 0] * s_pw[:, None]                        # (Cout, C)
    pw_shift = (s_pw * (params["b_pw"] - params["pw_mean"])
                + params["pw_beta"]).reshape(Cout, 1)                        # (Cout, 1)

    BN = _choose_batch_block(N, C, Cout, HW)
    assert N % BN == 0
    n_steps = N // BN

    # Route the 1x1 conv to the MXU only when the contraction is large enough to
    # amortize the weight push; the toy head (C=4, Cout=8) stays on the VPU.
    use_mxu = C >= 64 and Cout >= 64

    # Tile per-channel depthwise params across the BN images stacked on sublanes.
    w_dw_t = jnp.tile(w_dw, (1, BN))[:, :, None]            # (KH*KW, BN*C, 1)
    dw_shift_t = jnp.tile(dw_shift, (BN,))[:, None]         # (BN*C, 1)

    if use_mxu:
        # Block-diagonal so the whole batch block is one matmul; degenerates to
        # plain w_pw when BN == 1 (the usual case at real channel counts).
        w_pw_k = jnp.kron(jnp.eye(BN, dtype=w_pw.dtype), w_pw)     # (BN*Cout, BN*C)
        wpw_spec = pl.BlockSpec((BN * Cout, BN * C), lambda b: (0, 0))
    else:
        w_pw_k = jnp.transpose(w_pw, (1, 0))[:, :, None]           # (C, Cout, 1)
        wpw_spec = pl.BlockSpec((C, Cout, 1), lambda b: (0, 0, 0))

    # NCHW stays NCHW: a free reshape puts N*C on sublanes and H*W on lanes.
    x_flat = x_nchw.reshape(N * C, HW)

    kernel = _make_dsconv_kernel(KH, KW, H, W, BN, C, Cout, use_mxu)
    out = pl.pallas_call(
        kernel,
        out_shape=jax.ShapeDtypeStruct((N, Cout, L), jnp.float32),
        grid_spec=pltpu.PrefetchScalarGridSpec(
            num_scalar_prefetch=0,
            grid=(n_steps,),
            in_specs=[
                pl.BlockSpec((BN * C, HW), lambda b: (b, 0)),
                # Grid-invariant weights / shifts.
                # TODO(synk): once realistic shapes give >1 grid step, mark these
                # pipeline_mode=pl.Buffered(1) (or copy once to VMEM scratch) so
                # they are not double-buffered / re-fetched per step.
                pl.BlockSpec((KH * KW, BN * C, 1), lambda b: (0, 0, 0)),
                pl.BlockSpec((BN * C, 1), lambda b: (0, 0)),
                wpw_spec,
                pl.BlockSpec((Cout, 1), lambda b: (0, 0)),
            ],
            out_specs=pl.BlockSpec((BN, Cout, L), lambda b: (b, 0, 0)),
        ),
        compiler_params=pltpu.CompilerParams(
            dimension_semantics=("parallel",),
            vmem_limit_bytes=32 << 20,
        ),
    )(x_flat, w_dw_t, dw_shift_t, w_pw_k, pw_shift)

    # Only the W crop remains; rows i >= Ho were never written by the kernel.
    # TODO(synk): when fused with a consumer, keep the (Ho, W) padded layout and
    # crop there instead of paying this slice.
    return out.reshape(N, Cout, Ho, W)[:, :, :, :Wo]


def _reference(x_nchw, params, kernel_size=3):
    """Pure-JAX NCHW reference matching the PyTorch module (BN in eval mode)."""
    eps = 1e-5
    C = x_nchw.shape[1]
    y = lax.conv_general_dilated(
        x_nchw, params["w_dw"], window_strides=(1, 1), padding="VALID",
        dimension_numbers=("NCHW", "OIHW", "NCHW"), feature_group_count=C)
    y = y + params["b_dw"].reshape(1, -1, 1, 1)
    y = (y - params["dw_mean"].reshape(1, -1, 1, 1)) / jnp.sqrt(
        params["dw_var"].reshape(1, -1, 1, 1) + eps)
    y = y * params["dw_gamma"].reshape(1, -1, 1, 1) + params["dw_beta"].reshape(1, -1, 1, 1)
    y = jnp.maximum(y, 0.0)

    z = lax.conv_general_dilated(
        y, params["w_pw"], window_strides=(1, 1), padding="VALID",
        dimension_numbers=("NCHW", "OIHW", "NCHW"))
    z = z + params["b_pw"].reshape(1, -1, 1, 1)
    z = (z - params["pw_mean"].reshape(1, -1, 1, 1)) / jnp.sqrt(
        params["pw_var"].reshape(1, -1, 1, 1) + eps)
    z = z * params["pw_gamma"].reshape(1, -1, 1, 1) + params["pw_beta"].reshape(1, -1, 1, 1)
    return jnp.maximum(z, 0.0)


def _init_params(key, in_channels, out_channels, kernel_size):
    ks = jax.random.split(key, 12)
    C, Cout, K = in_channels, out_channels, kernel_size
    return {
        "w_dw": 0.1 * jax.random.normal(ks[0], (C, 1, K, K), jnp.float32),
        "b_dw": 0.1 * jax.random.normal(ks[1], (C,), jnp.float32),
        "dw_gamma": 1.0 + 0.1 * jax.random.normal(ks[2], (C,), jnp.float32),
        "dw_beta": 0.1 * jax.random.normal(ks[3], (C,), jnp.float32),
        "dw_mean": 0.1 * jax.random.normal(ks[4], (C,), jnp.float32),
        "dw_var": 1.0 + 0.1 * jnp.abs(jax.random.normal(ks[5], (C,), jnp.float32)),
        "w_pw": 0.1 * jax.random.normal(ks[6], (Cout, C, 1, 1), jnp.float32),
        "b_pw": 0.1 * jax.random.normal(ks[7], (Cout,), jnp.float32),
        "pw_gamma": 1.0 + 0.1 * jax.random.normal(ks[8], (Cout,), jnp.float32),
        "pw_beta": 0.1 * jax.random.normal(ks[9], (Cout,), jnp.float32),
        "pw_mean": 0.1 * jax.random.normal(ks[10], (Cout,), jnp.float32),
        "pw_var": 1.0 + 0.1 * jnp.abs(jax.random.normal(ks[11], (Cout,), jnp.float32)),
    }


if __name__ == "__main__":
    key = jax.random.PRNGKey(0)
    k_x, k_p = jax.random.split(key)

    # Small shapes consistent with the module: N=2, C_in=4, C_out=8, H=W=16, k=3.
    N, C_in, C_out, H, W, K = 2, 4, 8, 16, 16, 3
    x = jax.random.normal(k_x, (N, C_in, H, W), jnp.float32)
    params = _init_params(k_p, C_in, C_out, K)

    fn = jax.jit(functools.partial(depth_separable_conv2d_pallas, kernel_size=K))
    out = fn(x, params)
    out = jax.block_until_ready(out)

    ref = _reference(x, params, kernel_size=K)
    assert out.shape == ref.shape == (N, C_out, H - K + 1, W - K + 1)
    err = float(jnp.max(jnp.abs(out - ref)))
    assert jnp.allclose(out, ref, atol=1e-3, rtol=1e-3), err

    print("KERNEL_OK")
</pallas_src>

<mosaic_0001>
module attributes {stable_mosaic.version = 11 : i64} {
  func.func @kernel(%arg0: i32, %arg1: memref<8x256xf32, #tpu.memory_space<vmem>>, %arg2: memref<9x8x1xf32, #tpu.memory_space<vmem>>, %arg3: memref<8x1xf32, #tpu.memory_space<vmem>>, %arg4: memref<4x8x1xf32, #tpu.memory_space<vmem>>, %arg5: memref<8x1xf32, #tpu.memory_space<vmem>>, %arg6: memref<2x8x224xf32, #tpu.memory_space<vmem>>) attributes {dimension_semantics = [#tpu.dimension_semantics<parallel>], iteration_bounds = array<i64: 1>, scalar_prefetch = 0 : i64, scratch_operands = 0 : i64, tpu.core_type = #tpu.core_type<tc>, window_params = [{transform_indices = @transform_0, window_bounds = array<i64: 8, 256>}, {pipeline_mode = #tpu.pipeline_mode<synchronous>, transform_indices = @transform_1, window_bounds = array<i64: 9, 8, 1>}, {pipeline_mode = #tpu.pipeline_mode<synchronous>, transform_indices = @transform_2, window_bounds = array<i64: 8, 1>}, {pipeline_mode = #tpu.pipeline_mode<synchronous>, transform_indices = @transform_3, window_bounds = array<i64: 4, 8, 1>}, {pipeline_mode = #tpu.pipeline_mode<synchronous>, transform_indices = @transform_4, window_bounds = array<i64: 8, 1>}, {transform_indices = @transform_5, window_bounds = array<i64: 2, 8, 224>}]} {
    %c0 = arith.constant 0 : index
    %c0_0 = arith.constant 0 : index
    %0 = vector.load %arg1[%c0, %c0_0] : memref<8x256xf32, #tpu.memory_space<vmem>>, vector<8x256xf32>
    %c0_1 = arith.constant 0 : index
    %c0_2 = arith.constant 0 : index
    %c0_3 = arith.constant 0 : index
    %1 = vector.load %arg2[%c0_1, %c0_2, %c0_3] : memref<9x8x1xf32, #tpu.memory_space<vmem>>, vector<9x8x1xf32>
    %2 = vector.extract_strided_slice %1 {offsets = [0, 0, 0], sizes = [1, 8, 1], strides = [1, 1, 1]} : vector<9x8x1xf32> to vector<1x8x1xf32>
    %3 = vector.shape_cast %2 : vector<1x8x1xf32> to vector<8x1xf32>
    %4 = vector.broadcast %3 : vector<8x1xf32> to vector<8x256xf32>
    %5 = arith.mulf %0, %4 : vector<8x256xf32>
    %c255_i32 = arith.constant 255 : i32
    %6 = tpu.dynamic_rotate %0 by %c255_i32 dim 1 : vector<8x256xf32>, i32 -> vector<8x256xf32>
    %7 = vector.extract_strided_slice %1 {offsets = [1, 0, 0], sizes = [1, 8, 1], strides = [1, 1, 1]} : vector<9x8x1xf32> to vector<1x8x1xf32>
    %8 = vector.shape_cast %7 : vector<1x8x1xf32> to vector<8x1xf32>
    %9 = vector.broadcast %8 : vector<8x1xf32> to vector<8x256xf32>
    %10 = arith.mulf %6, %9 : vector<8x256xf32>
    %11 = arith.addf %5, %10 : vector<8x256xf32>
    %c254_i32 = arith.constant 254 : i32
    %12 = tpu.dynamic_rotate %0 by %c254_i32 dim 1 : vector<8x256xf32>, i32 -> vector<8x256xf32>
    %13 = vector.extract_strided_slice %1 {offsets = [2, 0, 0], sizes = [1, 8, 1], strides = [1, 1, 1]} : vector<9x8x1xf32> to vector<1x8x1xf32>
    %14 = vector.shape_cast %13 : vector<1x8x1xf32> to vector<8x1xf32>
    %15 = vector.broadcast %14 : vector<8x1xf32> to vector<8x256xf32>
    %16 = arith.mulf %12, %15 : vector<8x256xf32>
    %17 = arith.addf %11, %16 : vector<8x256xf32>
    %c240_i32 = arith.constant 240 : i32
    %18 = tpu.dynamic_rotate %0 by %c240_i32 dim 1 : vector<8x256xf32>, i32 -> vector<8x256xf32>
    %19 = vector.extract_strided_slice %1 {offsets = [3, 0, 0], sizes = [1, 8, 1], strides = [1, 1, 1]} : vector<9x8x1xf32> to vector<1x8x1xf32>
    %20 = vector.shape_cast %19 : vector<1x8x1xf32> to vector<8x1xf32>
    %21 = vector.broadcast %20 : vector<8x1xf32> to vector<8x256xf32>
    %22 = arith.mulf %18, %21 : vector<8x256xf32>
    %23 = arith.addf %17, %22 : vector<8x256xf32>
    %c239_i32 = arith.constant 239 : i32
    %24 = tpu.dynamic_rotate %0 by %c239_i32 dim 1 : vector<8x256xf32>, i32 -> vector<8x256xf32>
    %25 = vector.extract_strided_slice %1 {offsets = [4, 0, 0], sizes = [1, 8, 1], strides = [1, 1, 1]} : vector<9x8x1xf32> to vector<1x8x1xf32>
    %26 = vector.shape_cast %25 : vector<1x8x1xf32> to vector<8x1xf32>
    %27 = vector.broadcast %26 : vector<8x1xf32> to vector<8x256xf32>
    %28 = arith.mulf %24, %27 : vector<8x256xf32>
    %29 = arith.addf %23, %28 : vector<8x256xf32>
    %c238_i32 = arith.constant 238 : i32
    %30 = tpu.dynamic_rotate %0 by %c238_i32 dim 1 : vector<8x256xf32>, i32 -> vector<8x256xf32>
    %31 = vector.extract_strided_slice %1 {offsets = [5, 0, 0], sizes = [1, 8, 1], strides = [1, 1, 1]} : vector<9x8x1xf32> to vector<1x8x1xf32>
    %32 = vector.shape_cast %31 : vector<1x8x1xf32> to vector<8x1xf32>
    %33 = vector.broadcast %32 : vector<8x1xf32> to vector<8x256xf32>
    %34 = arith.mulf %30, %33 : vector<8x256xf32>
    %35 = arith.addf %29, %34 : vector<8x256xf32>
    %c224_i32 = arith.constant 224 : i32
    %36 = tpu.dynamic_rotate %0 by %c224_i32 dim 1 : vector<8x256xf32>, i32 -> vector<8x256xf32>
    %37 = vector.extract_strided_slice %1 {offsets = [6, 0, 0], sizes = [1, 8, 1], strides = [1, 1, 1]} : vector<9x8x1xf32> to vector<1x8x1xf32>
    %38 = vector.shape_cast %37 : vector<1x8x1xf32> to vector<8x1xf32>
    %39 = vector.broadcast %38 : vector<8x1xf32> to vector<8x256xf32>
    %40 = arith.mulf %36, %39 : vector<8x256xf32>
    %41 = arith.addf %35, %40 : vector<8x256xf32>
    %c223_i32 = arith.constant 223 : i32
    %42 = tpu.dynamic_rotate %0 by %c223_i32 dim 1 : vector<8x256xf32>, i32 -> vector<8x256xf32>
    %43 = vector.extract_strided_slice %1 {offsets = [7, 0, 0], sizes = [1, 8, 1], strides = [1, 1, 1]} : vector<9x8x1xf32> to vector<1x8x1xf32>
    %44 = vector.shape_cast %43 : vector<1x8x1xf32> to vector<8x1xf32>
    %45 = vector.broadcast %44 : vector<8x1xf32> to vector<8x256xf32>
    %46 = arith.mulf %42, %45 : vector<8x256xf32>
    %47 = arith.addf %41, %46 : vector<8x256xf32>
    %c222_i32 = arith.constant 222 : i32
    %48 = tpu.dynamic_rotate %0 by %c222_i32 dim 1 : vector<8x256xf32>, i32 -> vector<8x256xf32>
    %49 = vector.extract_strided_slice %1 {offsets = [8, 0, 0], sizes = [1, 8, 1], strides = [1, 1, 1]} : vector<9x8x1xf32> to vector<1x8x1xf32>
    %50 = vector.shape_cast %49 : vector<1x8x1xf32> to vector<8x1xf32>
    %51 = vector.broadcast %50 : vector<8x1xf32> to vector<8x256xf32>
    %52 = arith.mulf %48, %51 : vector<8x256xf32>
    %53 = arith.addf %47, %52 : vector<8x256xf32>
    %c0_4 = arith.constant 0 : index
    %c0_5 = arith.constant 0 : index
    %54 = vector.load %arg3[%c0_4, %c0_5] : memref<8x1xf32, #tpu.memory_space<vmem>>, vector<8x1xf32>
    %55 = vector.broadcast %54 : vector<8x1xf32> to vector<8x256xf32>
    %56 = arith.addf %53, %55 : vector<8x256xf32>
    %cst = arith.constant 0.000000e+00 : f32
    %57 = vector.broadcast %cst : f32 to vector<8x256xf32>
    %58 = arith.maximumf %56, %57 : vector<8x256xf32>
    %59 = vector.shape_cast %58 : vector<8x256xf32> to vector<2x4x256xf32>
    %c0_6 = arith.constant 0 : index
    %c0_7 = arith.constant 0 : index
    %c0_8 = arith.constant 0 : index
    %60 = vector.load %arg4[%c0_6, %c0_7, %c0_8] : memref<4x8x1xf32, #tpu.memory_space<vmem>>, vector<1x8x1xf32>
    %61 = vector.shape_cast %60 : vector<1x8x1xf32> to vector<8x1xf32>
    %62 = vector.shape_cast %61 : vector<8x1xf32> to vector<1x8x1xf32>
    %63 = vector.extract_strided_slice %59 {offsets = [0, 0, 0], sizes = [2, 1, 256], strides = [1, 1, 1]} : vector<2x4x256xf32> to vector<2x1x256xf32>
    %64 = vector.shape_cast %63 : vector<2x1x256xf32> to vector<2x256xf32>
    %65 = vector.shape_cast %64 : vector<2x256xf32> to vector<2x1x256xf32>
    %66 = vector.broadcast %62 : vector<1x8x1xf32> to vector<2x8x256xf32>
    %67 = vector.broadcast %65 : vector<2x1x256xf32> to vector<2x8x256xf32>
    %68 = arith.mulf %66, %67 : vector<2x8x256xf32>
    %c1 = arith.constant 1 : index
    %c0_9 = arith.constant 0 : index
    %c0_10 = arith.constant 0 : index
    %69 = vector.load %arg4[%c1, %c0_9, %c0_10] : memref<4x8x1xf32, #tpu.memory_space<vmem>>, vector<1x8x1xf32>
    %70 = vector.shape_cast %69 : vector<1x8x1xf32> to vector<8x1xf32>
    %71 = vector.shape_cast %70 : vector<8x1xf32> to vector<1x8x1xf32>
    %72 = vector.extract_strided_slice %59 {offsets = [0, 1, 0], sizes = [2, 1, 256], strides = [1, 1, 1]} : vector<2x4x256xf32> to vector<2x1x256xf32>
    %73 = vector.shape_cast %72 : vector<2x1x256xf32> to vector<2x256xf32>
    %74 = vector.shape_cast %73 : vector<2x256xf32> to vector<2x1x256xf32>
    %75 = vector.broadcast %71 : vector<1x8x1xf32> to vector<2x8x256xf32>
    %76 = vector.broadcast %74 : vector<2x1x256xf32> to vector<2x8x256xf32>
    %77 = arith.mulf %75, %76 : vector<2x8x256xf32>
    %78 = arith.addf %68, %77 : vector<2x8x256xf32>
    %c2 = arith.constant 2 : index
    %c0_11 = arith.constant 0 : index
    %c0_12 = arith.constant 0 : index
    %79 = vector.load %arg4[%c2, %c0_11, %c0_12] : memref<4x8x1xf32, #tpu.memory_space<vmem>>, vector<1x8x1xf32>
    %80 = vector.shape_cast %79 : vector<1x8x1xf32> to vector<8x1xf32>
    %81 = vector.shape_cast %80 : vector<8x1xf32> to vector<1x8x1xf32>
    %82 = vector.extract_strided_slice %59 {offsets = [0, 2, 0], sizes = [2, 1, 256], strides = [1, 1, 1]} : vector<2x4x256xf32> to vector<2x1x256xf32>
    %83 = vector.shape_cast %82 : vector<2x1x256xf32> to vector<2x256xf32>
    %84 = vector.shape_cast %83 : vector<2x256xf32> to vector<2x1x256xf32>
    %85 = vector.broadcast %81 : vector<1x8x1xf32> to vector<2x8x256xf32>
    %86 = vector.broadcast %84 : vector<2x1x256xf32> to vector<2x8x256xf32>
    %87 = arith.mulf %85, %86 : vector<2x8x256xf32>
    %88 = arith.addf %78, %87 : vector<2x8x256xf32>
    %c3 = arith.constant 3 : index
    %c0_13 = arith.constant 0 : index
    %c0_14 = arith.constant 0 : index
    %89 = vector.load %arg4[%c3, %c0_13, %c0_14] : memref<4x8x1xf32, #tpu.memory_space<vmem>>, vector<1x8x1xf32>
    %90 = vector.shape_cast %89 : vector<1x8x1xf32> to vector<8x1xf32>
    %91 = vector.shape_cast %90 : vector<8x1xf32> to vector<1x8x1xf32>
    %92 = vector.extract_strided_slice %59 {offsets = [0, 3, 0], sizes = [2, 1, 256], strides = [1, 1, 1]} : vector<2x4x256xf32> to vector<2x1x256xf32>
    %93 = vector.shape_cast %92 : vector<2x1x256xf32> to vector<2x256xf32>
    %94 = vector.shape_cast %93 : vector<2x256xf32> to vector<2x1x256xf32>
    %95 = vector.broadcast %91 : vector<1x8x1xf32> to vector<2x8x256xf32>
    %96 = vector.broadcast %94 : vector<2x1x256xf32> to vector<2x8x256xf32>
    %97 = arith.mulf %95, %96 : vector<2x8x256xf32>
    %98 = arith.addf %88, %97 : vector<2x8x256xf32>
    %c0_15 = arith.constant 0 : index
    %c0_16 = arith.constant 0 : index
    %99 = vector.load %arg5[%c0_15, %c0_16] : memref<8x1xf32, #tpu.memory_space<vmem>>, vector<8x1xf32>
    %100 = vector.shape_cast %99 : vector<8x1xf32> to vector<1x8x1xf32>
    %101 = vector.broadcast %100 : vector<1x8x1xf32> to vector<2x8x256xf32>
    %102 = arith.addf %98, %101 : vector<2x8x256xf32>
    %cst_17 = arith.constant 0.000000e+00 : f32
    %103 = vector.broadcast %cst_17 : f32 to vector<2x8x256xf32>
    %104 = arith.maximumf %102, %103 : vector<2x8x256xf32>
    %105 = vector.extract_strided_slice %104 {offsets = [0, 0, 0], sizes = [2, 8, 224], strides = [1, 1, 1]} : vector<2x8x256xf32> to vector<2x8x224xf32>
    %c0_18 = arith.constant 0 : index
    %c0_19 = arith.constant 0 : index
    %c0_20 = arith.constant 0 : index
    %106 = vector.load %arg6[%c0_18, %c0_19, %c0_20] : memref<2x8x224xf32, #tpu.memory_space<vmem>>, vector<2x8x224xf32>
    tpu.vector_store %arg6[%c0_18, %c0_19, %c0_20], %105 {strides = array<i32>} : memref<2x8x224xf32, #tpu.memory_space<vmem>>, vector<2x8x224xf32>,
    return
  }
  func.func @transform_0(%arg0: i32) -> (i32, i32) {
    %c0_i32 = arith.constant 0 : i32
    %c0_i32_0 = arith.constant 0 : i32
    return %arg0, %c0_i32 : i32, i32
  }
  func.func @transform_1(%arg0: i32) -> (i32, i32, i32) {
    %c0_i32 = arith.constant 0 : i32
    %c0_i32_0 = arith.constant 0 : i32
    %c0_i32_1 = arith.constant 0 : i32
    %c0_i32_2 = arith.constant 0 : i32
    return %c0_i32, %c0_i32_0, %c0_i32_1 : i32, i32, i32
  }
  func.func @transform_2(%arg0: i32) -> (i32, i32) {
    %c0_i32 = arith.constant 0 : i32
    %c0_i32_0 = arith.constant 0 : i32
    %c0_i32_1 = arith.constant 0 : i32
    return %c0_i32, %c0_i32_0 : i32, i32
  }
  func.func @transform_3(%arg0: i32) -> (i32, i32, i32) {
    %c0_i32 = arith.constant 0 : i32
    %c0_i32_0 = arith.constant 0 : i32
    %c0_i32_1 = arith.constant 0 : i32
    %c0_i32_2 = arith.constant 0 : i32
    return %c0_i32, %c0_i32_0, %c0_i32_1 : i32, i32, i32
  }
  func.func @transform_4(%arg0: i32) -> (i32, i32) {
    %c0_i32 = arith.constant 0 : i32
    %c0_i32_0 = arith.constant 0 : i32
    %c0_i32_1 = arith.constant 0 : i32
    return %c0_i32, %c0_i32_0 : i32, i32
  }
  func.func @transform_5(%arg0: i32) -> (i32, i32, i32) {
    %c0_i32 = arith.constant 0 : i32
    %c0_i32_0 = arith.constant 0 : i32
    %c0_i32_1 = arith.constant 0 : i32
    return %arg0, %c0_i32, %c0_i32_0 : i32, i32, i32
  }
}

</mosaic_0001>

<llo_original>
// kernel: tile.18
$region0: #{tile.18}
  #allocation0 [shape = 's32[1]{0}', space=sflag, size = 0x4, scoped, tag = 'scoped memory for tile.18']
  %s0 = inlined_call_operand.vmem [shape: f32[4], index: 0, kind: input, shape index: {}]
  %s1 = inlined_call_operand.vmem [shape: f32[2,4], index: 1, kind: output, shape index: {}]
  // Predicated region
  $region2: #{tile.18} parent=0 // pred_check
    _
  $region3: #{tile.18} parent=0 // pred_check_branch
    %3 = sbr.rel (0) target = $region5
  $region4: #{tile.18} parent=0 // pred_region
    _
  $region5: #{tile.18} parent=0 // pred_fallthru
    _
  %v4 = vld [vmem:[%s0] ss:$0 sm:$0xff]
  %5 = vst [vmem:[%s1] sm:$0x3] %v4

// kernel: tile.0
$region0: #{tile.0}
  %s0 = inlined_call_operand.vmem [shape: f32[2,4], index: 0, kind: input, shape index: {}]
  %s1 = inlined_call_operand.vmem [shape: f32[8,1], index: 1, kind: output, shape index: {}]
  $region1: #{tile.0} parent=0
    #allocation0 [shape = 'u8[4096]{0}', space=vmem, size = 0x1000, scoped, tag = 'scoped mem for input reshape']
    %s3 = sshllo.u32 0, 2
    %v4 = vld [vmem:[%s0] sm:%s3]
    %5 = vst [vmem:[#allocation0] sm:%s3] %v4
    %v6 = vld [vmem:[#allocation0] sm:$0x3]
    %vm7 = vcmask 7168
    %8 = vst.msk [vmem:[%s1] ss:$4 sm:$0x3] %vm7, %v6
    %v9 = vld [vmem:[#allocation0] sm:$0x3]
    %10 = vrot.lane.b32.xlu0 %v9, 127
    %v11 = vpop.permute.xlu0 %10
    %vm12 = vcmask 7168
    %s13 = scalar_lea.vmem %s1, 1
    %14 = vst.msk [vmem:[%s13] ss:$4 sm:$0x3] %vm12, %v11
    %v15 = vld [vmem:[#allocation0] sm:$0x3]
    %16 = vrot.lane.b32.xlu0 %v15, 126
    %v17 = vpop.permute.xlu0 %16
    %vm18 = vcmask 7168
    %s19 = scalar_lea.vmem %s1, 2
    %20 = vst.msk [vmem:[%s19] ss:$4 sm:$0x3] %vm18, %v17
    %v21 = vld [vmem:[#allocation0] sm:$0x3]
    %22 = vrot.lane.b32.xlu0 %v21, 125
    %v23 = vpop.permute.xlu0 %22
    %vm24 = vcmask 7168
    %s25 = scalar_lea.vmem %s1, 3
    %26 = vst.msk [vmem:[%s25] ss:$4 sm:$0x3] %vm24, %v23

// kernel: depth_separable_conv2d_pallas.1
$region0: #{depth_separable_conv2d_pallas.1}
  #allocation0 [shape = 'u32[]', space=smem, size = 0x4, offset = 0x4, fixed_abs, tag = 'smem constant byte address 0x4 - core index']
  #allocation1 [shape = 'u32[144,128]{1,0:T(1,128)}', space=vmem, size = 0x12000, scoped, tag = 'internal scratch']
  %s0 = inlined_call_operand.vmem [shape: f32[8,256], index: 0, kind: input, shape index: {}]
  %s1 = inlined_call_operand.vmem [shape: f32[9,8,1], index: 1, kind: input, shape index: {}]
  %s2 = inlined_call_operand.vmem [shape: f32[8,1], index: 2, kind: input, shape index: {}]
  %s3 = inlined_call_operand.vmem [shape: f32[4,8,1], index: 3, kind: input, shape index: {}]
  %s4 = inlined_call_operand.vmem [shape: f32[8,1], index: 4, kind: input, shape index: {}]
  %s5 = inlined_call_operand.vmem [shape: f32[2,8,224], index: 5, kind: output, shape index: {}]
  %s6 = sld [smem:[#allocation0]]
  $region30: #{depth_separable_conv2d_pallas.1} parent=0
    _
  %s8 = ssub.s32 1, %s6
  %s9 = scalar_select 0, %s8, %s6
  // Predicated region
  $region2: #{depth_separable_conv2d_pallas.1} parent=0 // pred_check
    _
  $region3: #{depth_separable_conv2d_pallas.1} parent=0 // pred_check_branch
    %11 = sbr.rel (0) target = $region5
  $region4: #{depth_separable_conv2d_pallas.1} parent=0 // pred_region
    _
  $region5: #{depth_separable_conv2d_pallas.1} parent=0 // pred_fallthru
    _
  // Predicated region
  $region6: #{depth_separable_conv2d_pallas.1} parent=0 // pred_check
    _
  $region7: #{depth_separable_conv2d_pallas.1} parent=0 // pred_check_branch
    %13 = sbr.rel (0) target = $region9
  $region8: #{depth_separable_conv2d_pallas.1} parent=0 // pred_region
    _
  $region9: #{depth_separable_conv2d_pallas.1} parent=0 // pred_fallthru
    _
  // Predicated region
  $region10: #{depth_separable_conv2d_pallas.1} parent=0 // pred_check
    _
  $region11: #{depth_separable_conv2d_pallas.1} parent=0 // pred_check_branch
    %15 = sbr.rel (0) target = $region13
  $region12: #{depth_separable_conv2d_pallas.1} parent=0 // pred_region
    _
  $region13: #{depth_separable_conv2d_pallas.1} parent=0 // pred_fallthru
    _
  // Predicated region
  $region14: #{depth_separable_conv2d_pallas.1} parent=0 // pred_check
    _
  $region15: #{depth_separable_conv2d_pallas.1} parent=0 // pred_check_branch
    %17 = sbr.rel (0) target = $region17
  $region16: #{depth_separable_conv2d_pallas.1} parent=0 // pred_region
    _
  $region17: #{depth_separable_conv2d_pallas.1} parent=0 // pred_fallthru
    _
  // Predicated region
  $region18: #{depth_separable_conv2d_pallas.1} parent=0 // pred_check
    _
  $region19: #{depth_separable_conv2d_pallas.1} parent=0 // pred_check_branch
    %19 = sbr.rel (0) target = $region21
  $region20: #{depth_separable_conv2d_pallas.1} parent=0 // pred_region
    _
  $region21: #{depth_separable_conv2d_pallas.1} parent=0 // pred_fallthru
    _
  %v20 = vld [vmem:[%s0] sm:$0xff]
  %v21 = vld [vmem:[%s0 + $0x8] sm:$0xff]
  %v22 = vld [vmem:[%s1] sm:$0xff]
  %v23 = vld [vmem:[%s1 + $0x8] sm:$0xff]
  %v24 = vld [vmem:[%s1 + $0x10] sm:$0xff]
  %v25 = vld [vmem:[%s1 + $0x18] sm:$0xff]
  %v26 = vld [vmem:[%s1 + $0x20] sm:$0xff]
  %v27 = vld [vmem:[%s1 + $0x28] sm:$0xff]
  %v28 = vld [vmem:[%s1 + $0x30] sm:$0xff]
  %v29 = vld [vmem:[%s1 + $0x38] sm:$0xff]
  %v30 = vld [vmem:[%s1 + $0x40] sm:$0xff]
  %32 = vset.pattern.permute.xlu0 0
  %33 = vperm.xlu0 %32, %v22
  %v34 = vpop.permute.xlu0 %33
  %v36 = vmul.f32 %v20, %v34
  %v37 = vmul.f32 %v21, %v34
  %38 = vrot.lane.b32.xlu0 %v20, 127
  %v39 = vpop.permute.xlu0 %38
  %40 = vrot.lane.b32.xlu0 %v21, 127
  %v41 = vpop.permute.xlu0 %40
  %v42 = vlaneseq
  %v43 = vand.u32 %v42, 127
  %vm44 = vcmp.lt.s32.totalorder %v43, 127
  %v45 = vsel %vm44, %v39, %v41
  %v46 = vsel %vm44, %v41, %v39
  %48 = vset.pattern.permute.xlu0 0
  %49 = vperm.xlu0 %48, %v23
  %v50 = vpop.permute.xlu0 %49
  %v52 = vmul.f32 %v45, %v50
  %v53 = vmul.f32 %v46, %v50
  %v54 = vadd.f32 %v36, %v52
  %v55 = vadd.f32 %v37, %v53
  %56 = vrot.lane.b32.xlu0 %v20, 126
  %v57 = vpop.permute.xlu0 %56
  %58 = vrot.lane.b32.xlu0 %v21, 126
  %v59 = vpop.permute.xlu0 %58
  %vm60 = vcmp.lt.s32.totalorder %v43, 126
  %v61 = vsel %vm60, %v57, %v59
  %v62 = vsel %vm60, %v59, %v57
  %64 = vset.pattern.permute.xlu0 0
  %65 = vperm.xlu0 %64, %v24
  %v66 = vpop.permute.xlu0 %65
  %v68 = vmul.f32 %v61, %v66
  %v69 = vmul.f32 %v62, %v66
  %v70 = vadd.f32 %v54, %v68
  %v71 = vadd.f32 %v55, %v69
  %72 = vrot.lane.b32.xlu0 %v20, 112
  %v73 = vpop.permute.xlu0 %72
  %74 = vrot.lane.b32.xlu0 %v21, 112
  %v75 = vpop.permute.xlu0 %74
  %vm76 = vcmp.lt.s32.totalorder %v43, 112
  %v77 = vsel %vm76, %v73, %v75
  %v78 = vsel %vm76, %v75, %v73
  %80 = vset.pattern.permute.xlu0 0
  %81 = vperm.xlu0 %80, %v25
  %v82 = vpop.permute.xlu0 %81
  %v84 = vmul.f32 %v77, %v82
  %v85 = vmul.f32 %v78, %v82
  %v86 = vadd.f32 %v70, %v84
  %v87 = vadd.f32 %v71, %v85
  %88 = vrot.lane.b32.xlu0 %v20, 111
  %v89 = vpop.permute.xlu0 %88
  %90 = vrot.lane.b32.xlu0 %v21, 111
  %v91 = vpop.permute.xlu0 %90
  %vm92 = vcmp.lt.s32.totalorder %v43, 111
  %v93 = vsel %vm92, %v89, %v91
  %v94 = vsel %vm92, %v91, %v89
  %96 = vset.pattern.permute.xlu0 0
  %97 = vperm.xlu0 %96, %v26
  %v98 = vpop.permute.xlu0 %97
  %v100 = vmul.f32 %v93, %v98
  %v101 = vmul.f32 %v94, %v98
  %v102 = vadd.f32 %v86, %v100
  %v103 = vadd.f32 %v87, %v101
  %104 = vrot.lane.b32.xlu0 %v20, 110
  %v105 = vpop.permute.xlu0 %104
  %106 = vrot.lane.b32.xlu0 %v21, 110
  %v107 = vpop.permute.xlu0 %106
  %vm108 = vcmp.lt.s32.totalorder %v43, 110
  %v109 = vsel %vm108, %v105, %v107
  %v110 = vsel %vm108, %v107, %v105
  %112 = vset.pattern.permute.xlu0 0
  %113 = vperm.xlu0 %112, %v27
  %v114 = vpop.permute.xlu0 %113
  %v116 = vmul.f32 %v109, %v114
  %v117 = vmul.f32 %v110, %v114
  %v118 = vadd.f32 %v102, %v116
  %v119 = vadd.f32 %v103, %v117
  %120 = vrot.lane.b32.xlu0 %v20, 96
  %v121 = vpop.permute.xlu0 %120
  %122 = vrot.lane.b32.xlu0 %v21, 96
  %v123 = vpop.permute.xlu0 %122
  %vm124 = vcmp.lt.s32.totalorder %v43, 96
  %v125 = vsel %vm124, %v121, %v123
  %v126 = vsel %vm124, %v123, %v121
  %128 = vset.pattern.permute.xlu0 0
  %129 = vperm.xlu0 %128, %v28
  %v130 = vpop.permute.xlu0 %129
  %v132 = vmul.f32 %v125, %v130
  %v133 = vmul.f32 %v126, %v130
  %v134 = vadd.f32 %v118, %v132
  %v135 = vadd.f32 %v119, %v133
  %136 = vrot.lane.b32.xlu0 %v20, 95
  %v137 = vpop.permute.xlu0 %136
  %138 = vrot.lane.b32.xlu0 %v21, 95
  %v139 = vpop.permute.xlu0 %138
  %vm140 = vcmp.lt.s32.totalorder %v43, 95
  %v141 = vsel %vm140, %v137, %v139
  %v142 = vsel %vm140, %v139, %v137
  %144 = vset.pattern.permute.xlu0 0
  %145 = vperm.xlu0 %144, %v29
  %v146 = vpop.permute.xlu0 %145
  %v148 = vmul.f32 %v141, %v146
  %v149 = vmul.f32 %v142, %v146
  %v150 = vadd.f32 %v134, %v148
  %v151 = vadd.f32 %v135, %v149
  %152 = vrot.lane.b32.xlu0 %v20, 94
  %v153 = vpop.permute.xlu0 %152
  %154 = vrot.lane.b32.xlu0 %v21, 94
  %v155 = vpop.permute.xlu0 %154
  %vm156 = vcmp.lt.s32.totalorder %v43, 94
  %v157 = vsel %vm156, %v153, %v155
  %v158 = vsel %vm156, %v155, %v153
  %160 = vset.pattern.permute.xlu0 0
  %161 = vperm.xlu0 %160, %v30
  %v162 = vpop.permute.xlu0 %161
  %v164 = vmul.f32 %v157, %v162
  %v165 = vmul.f32 %v158, %v162
  %v166 = vadd.f32 %v150, %v164
  %v167 = vadd.f32 %v151, %v165
  %v168 = vld [vmem:[%s2] sm:$0xff]
  %170 = vset.pattern.permute.xlu0 0
  %171 = vperm.xlu0 %170, %v168
  %v172 = vpop.permute.xlu0 %171
  %v174 = vadd.f32 %v166, %v172
  %v175 = vadd.f32 %v167, %v172
  %v176 = vmax.f32 %v174, 0.0
  %v177 = vmax.f32 %v175, 0.0
  %v180 = vcombine.low %v176, %v177
  %v181 = vcombine.high %v176, %v177
  %v182 = vld [vmem:[%s3] sm:$0xff]
  %184 = vset.pattern.permute.xlu0 0
  %185 = vperm.xlu0 %184, %v182
  %v186 = vpop.permute.xlu0 %185
  %v188 = vlaneseq
  %v189 = vshrl.u32 %v188, 7
  %v190 = vsub.s32 0, %v189
  %v191 = vrot.slane %v180, %v190
  %v192 = vlaneseq
  %v193 = vshrl.u32 %v192, 7
  %v194 = vsub.s32 4, %v193
  %v195 = vrot.slane %v180, %v194
  %v196 = vlaneseq
  %v197 = vshrl.u32 %v196, 7
  %v198 = vsub.s32 0, %v197
  %v199 = vrot.slane %v181, %v198
  %v200 = vlaneseq
  %v201 = vshrl.u32 %v200, 7
  %v202 = vsub.s32 4, %v201
  %v203 = vrot.slane %v181, %v202
  %v208 = vlaneseq
  %v209 = vshrl.u32 %v208, 7
  %v210 = vsub.s32 0, %v209
  %v211 = vrot.slane %v191, %v210
  %v212 = vlaneseq
  %v213 = vshrl.u32 %v212, 7
  %v214 = vsub.s32 0, %v213
  %v215 = vrot.slane %v195, %v214
  %v216 = vlaneseq
  %v217 = vshrl.u32 %v216, 7
  %v218 = vsub.s32 0, %v217
  %v219 = vrot.slane %v199, %v218
  %v220 = vlaneseq
  %v221 = vshrl.u32 %v220, 7
  %v222 = vsub.s32 0, %v221
  %v223 = vrot.slane %v203, %v222
  %v224 = vmul.f32 %v186, %v211
  %v225 = vmul.f32 %v186, %v215
  %v226 = vmul.f32 %v186, %v219
  %v227 = vmul.f32 %v186, %v223
  %s228 = scalar_lea.vmem %s3, 8
  %v229 = vld [vmem:[%s228] sm:$0xff]
  %231 = vset.pattern.permute.xlu0 0
  %232 = vperm.xlu0 %231, %v229
  %v233 = vpop.permute.xlu0 %232
  %v235 = vlaneseq
  %v236 = vshrl.u32 %v235, 7
  %v237 = vsub.s32 1, %v236
  %v238 = vrot.slane %v180, %v237
  %v239 = vlaneseq
  %v240 = vshrl.u32 %v239, 7
  %v241 = vsub.s32 5, %v240
  %v242 = vrot.slane %v180, %v241
  %v243 = vlaneseq
  %v244 = vshrl.u32 %v243, 7
  %v245 = vsub.s32 1, %v244
  %v246 = vrot.slane %v181, %v245
  %v247 = vlaneseq
  %v248 = vshrl.u32 %v247, 7
  %v249 = vsub.s32 5, %v248
  %v250 = vrot.slane %v181, %v249
  %v255 = vlaneseq
  %v256 = vshrl.u32 %v255, 7
  %v257 = vsub.s32 1, %v256
  %v258 = vrot.slane %v238, %v257
  %v259 = vlaneseq
  %v260 = vshrl.u32 %v259, 7
  %v261 = vsub.s32 1, %v260
  %v262 = vrot.slane %v242, %v261
  %v263 = vlaneseq
  %v264 = vshrl.u32 %v263, 7
  %v265 = vsub.s32 1, %v264
  %v266 = vrot.slane %v246, %v265
  %v267 = vlaneseq
  %v268 = vshrl.u32 %v267, 7
  %v269 = vsub.s32 1, %v268
  %v270 = vrot.slane %v250, %v269
  %v271 = vmul.f32 %v233, %v258
  %v272 = vmul.f32 %v233, %v262
  %v273 = vmul.f32 %v233, %v266
  %v274 = vmul.f32 %v233, %v270
  %v275 = vadd.f32 %v224, %v271
  %v276 = vadd.f32 %v225, %v272
  %v277 = vadd.f32 %v226, %v273
  %v278 = vadd.f32 %v227, %v274
  %s279 = scalar_lea.vmem %s3, 16
  %v280 = vld [vmem:[%s279] sm:$0xff]
  %282 = vset.pattern.permute.xlu0 0
  %283 = vperm.xlu0 %282, %v280
  %v284 = vpop.permute.xlu0 %283
  %v286 = vlaneseq
  %v287 = vshrl.u32 %v286, 7
  %v288 = vsub.s32 2, %v287
  %v289 = vrot.slane %v180, %v288
  %v290 = vlaneseq
  %v291 = vshrl.u32 %v290, 7
  %v292 = vsub.s32 6, %v291
  %v293 = vrot.slane %v180, %v292
  %v294 = vlaneseq
  %v295 = vshrl.u32 %v294, 7
  %v296 = vsub.s32 2, %v295
  %v297 = vrot.slane %v181, %v296
  %v298 = vlaneseq
  %v299 = vshrl.u32 %v298, 7
  %v300 = vsub.s32 6, %v299
  %v301 = vrot.slane %v181, %v300
  %v306 = vlaneseq
  %v307 = vshrl.u32 %v306, 7
  %v308 = vsub.s32 2, %v307
  %v309 = vrot.slane %v289, %v308
  %v310 = vlaneseq
  %v311 = vshrl.u32 %v310, 7
  %v312 = vsub.s32 2, %v311
  %v313 = vrot.slane %v293, %v312
  %v314 = vlaneseq
  %v315 = vshrl.u32 %v314, 7
  %v316 = vsub.s32 2, %v315
  %v317 = vrot.slane %v297, %v316
  %v318 = vlaneseq
  %v319 = vshrl.u32 %v318, 7
  %v320 = vsub.s32 2, %v319
  %v321 = vrot.slane %v301, %v320
  %v322 = vmul.f32 %v284, %v309
  %v323 = vmul.f32 %v284, %v313
  %v324 = vmul.f32 %v284, %v317
  %v325 = vmul.f32 %v284, %v321
  %v326 = vadd.f32 %v275, %v322
  %v327 = vadd.f32 %v276, %v323
  %v328 = vadd.f32 %v277, %v324
  %v329 = vadd.f32 %v278, %v325
  %s330 = scalar_lea.vmem %s3, 24
  %v331 = vld [vmem:[%s330] sm:$0xff]
  %333 = vset.pattern.permute.xlu0 0
  %334 = vperm.xlu0 %333, %v331
  %v335 = vpop.permute.xlu0 %334
  %v337 = vlaneseq
  %v338 = vshrl.u32 %v337, 7
  %v339 = vsub.s32 3, %v338
  %v340 = vrot.slane %v180, %v339
  %v341 = vlaneseq
  %v342 = vshrl.u32 %v341, 7
  %v343 = vsub.s32 7, %v342
  %v344 = vrot.slane %v180, %v343
  %v345 = vlaneseq
  %v346 = vshrl.u32 %v345, 7
  %v347 = vsub.s32 3, %v346
  %v348 = vrot.slane %v181, %v347
  %v349 = vlaneseq
  %v350 = vshrl.u32 %v349, 7
  %v351 = vsub.s32 7, %v350
  %v352 = vrot.slane %v181, %v351
  %v357 = vlaneseq
  %v358 = vshrl.u32 %v357, 7
  %v359 = vsub.s32 3, %v358
  %v360 = vrot.slane %v340, %v359
  %v361 = vlaneseq
  %v362 = vshrl.u32 %v361, 7
  %v363 = vsub.s32 3, %v362
  %v364 = vrot.slane %v344, %v363
  %v365 = vlaneseq
  %v366 = vshrl.u32 %v365, 7
  %v367 = vsub.s32 3, %v366
  %v368 = vrot.slane %v348, %v367
  %v369 = vlaneseq
  %v370 = vshrl.u32 %v369, 7
  %v371 = vsub.s32 3, %v370
  %v372 = vrot.slane %v352, %v371
  %v373 = vmul.f32 %v335, %v360
  %v374 = vmul.f32 %v335, %v364
  %v375 = vmul.f32 %v335, %v368
  %v376 = vmul.f32 %v335, %v372
  %v377 = vadd.f32 %v326, %v373
  %v378 = vadd.f32 %v327, %v374
  %v379 = vadd.f32 %v328, %v375
  %v380 = vadd.f32 %v329, %v376
  %v381 = vld [vmem:[%s4] sm:$0xff]
  %383 = vset.pattern.permute.xlu0 0
  %384 = vperm.xlu0 %383, %v381
  %v385 = vpop.permute.xlu0 %384
  %v387 = vadd.f32 %v377, %v385
  %v388 = vadd.f32 %v378, %v385
  %v389 = vadd.f32 %v379, %v385
  %v390 = vadd.f32 %v380, %v385
  %v391 = vmax.f32 %v387, 0.0
  %v392 = vmax.f32 %v388, 0.0
  %v393 = vmax.f32 %v389, 0.0
  %v394 = vmax.f32 %v390, 0.0
  %395 = vst [vmem:[%s5] sm:$0xff] %v391
  %vm396 = vcmask 785408
  %397 = vst.msk [vmem:[%s5 + $0x8] sm:$0xff] %vm396, %v392
  %398 = vst [vmem:[%s5 + $0x10] sm:$0xff] %v393
  %399 = vst.msk [vmem:[%s5 + $0x18] sm:$0xff] %vm396, %v394
  // Predicated region
  $region22: #{depth_separable_conv2d_pallas.1} parent=0 // pred_check
    _
  $region23: #{depth_separable_conv2d_pallas.1} parent=0 // pred_check_branch
    %401 = sbr.rel (0) target = $region25
  $region24: #{depth_separable_conv2d_pallas.1} parent=0 // pred_region
    _
  $region25: #{depth_separable_conv2d_pallas.1} parent=0 // pred_fallthru
    _
  // Predicated region
  $region26: #{depth_separable_conv2d_pallas.1} parent=0 // pred_check
    _
  $region27: #{depth_separable_conv2d_pallas.1} parent=0 // pred_check_branch
    %403 = sbr.rel (0) target = $region29
  $region28: #{depth_separable_conv2d_pallas.1} parent=0 // pred_region
    _
  $region29: #{depth_separable_conv2d_pallas.1} parent=0 // pred_fallthru
    _

</llo_original>
